<compile_context>
chip_gen: v6e
topology: v6e:2x2x1
jax: 0.10.0
libtpu: 0.0.40
codegen_flags: <defaults>
</compile_context>

<pallas_src>
import math
import functools

import jax
import jax.numpy as jnp
from jax.experimental import pallas as pl
from jax.experimental.pallas import tpu as pltpu


def _sine_pe_kernel(alpha_ref, x_ref, pe_ref, o_ref, *, x_scale):
    # x_ref / o_ref: (1, tT, D) block for one batch element / T-tile.
    # pe_ref:        (tT, D)    positional-encoding tile (resident across b).
    alpha = alpha_ref[0].astype(jnp.float32)

    x = x_ref[0]
    if x_scale != 1.0:  # trace-time constant; mul elided for the default scale=False
        x = x * jnp.asarray(x_scale, x.dtype)

    # Add in f32, single cast at the store (better accuracy for bf16 inputs).
    out = x.astype(jnp.float32) + alpha * pe_ref[...]
    o_ref[0] = out.astype(o_ref.dtype)


def _choose_tile_t(T, D, itemsize):
    """Pick a sequence-tile length: ~1 MiB blocks, multiple of 8, divides T."""
    target = max(8, (1 << 20) // max(1, D * itemsize))
    target = max(8, (target // 8) * 8)
    for cand in range(min(target, T), 7, -1):
        if T % cand == 0 and cand % 8 == 0:
            return cand
    # Fall back to the full sequence (always legal: equals the array dim).
    return T


def sine_positional_embedding(x, alpha, *, embedding_dim, scale=False):
    """x: (B, T, D) float array, alpha: (1,) float array."""
    assert x.ndim == 3, "kernel expects (B, T, D) input"
    B, T, D = x.shape
    assert D == embedding_dim
    x_scale = math.sqrt(embedding_dim) if scale else 1.0

    # Precompute pe once (f32) in plain JAX; it is streamed per T-tile and kept
    # resident in VMEM across the (innermost) batch axis of the grid.
    position = jnp.arange(T, dtype=jnp.float32)[:, None]                 # (T, 1)
    div_term = jnp.exp(
        jnp.arange(0, D, 2, dtype=jnp.float32) * (-math.log(10000.0) / D)
    )                                                                    # (D//2,)
    angle = position * div_term                                          # (T, D//2)
    pe = jnp.stack([jnp.sin(angle), jnp.cos(angle)], axis=-1).reshape(T, D)

    tT = _choose_tile_t(T, D, jnp.dtype(x.dtype).itemsize)
    grid = (T // tT, B)  # batch innermost -> pe block index constant across b

    kernel = functools.partial(_sine_pe_kernel, x_scale=x_scale)

    return pl.pallas_call(
        kernel,
        out_shape=jax.ShapeDtypeStruct((B, T, D), x.dtype),
        grid=grid,
        in_specs=[
            pl.BlockSpec(memory_space=pltpu.SMEM),                 # alpha scalar
            pl.BlockSpec((1, tT, D), lambda t, b: (b, t, 0)),      # x tile
            pl.BlockSpec((tT, D), lambda t, b: (t, 0)),            # pe tile (b-invariant)
        ],
        out_specs=pl.BlockSpec((1, tT, D), lambda t, b: (b, t, 0)),
        compiler_params=pltpu.CompilerParams(
            dimension_semantics=("parallel", "parallel"),
        ),
    )(alpha, x, pe)


def _reference(x, alpha, *, embedding_dim, scale=False):
    """Pure-JAX reference mirroring the PyTorch module."""
    B, T, D = x.shape
    x_scale = math.sqrt(embedding_dim) if scale else 1.0
    position = jnp.arange(0, T, dtype=jnp.float32)[:, None]
    div_term = jnp.exp(
        jnp.arange(0, D, 2, dtype=jnp.float32) * -(math.log(10000.0) / D)
    )
    pe = jnp.zeros((T, D), jnp.float32)
    pe = pe.at[:, 0::2].set(jnp.sin(position * div_term))
    pe = pe.at[:, 1::2].set(jnp.cos(position * div_term))
    return x * x_scale + alpha[0] * pe[None, :, :]


if __name__ == "__main__":
    key = jax.random.PRNGKey(0)
    B, T, D = 2, 8, 32
    x = jax.random.normal(key, (B, T, D), dtype=jnp.float32)

    # Deterministic parameter init: nn.Parameter(torch.ones(1))
    alpha = jnp.ones((1,), dtype=jnp.float32)

    out = sine_positional_embedding(x, alpha, embedding_dim=D, scale=False)
    out = jax.block_until_ready(out)

    ref = _reference(x, alpha, embedding_dim=D, scale=False)
    assert out.shape == (B, T, D)
    assert jnp.allclose(out, ref, atol=1e-5, rtol=1e-5), "mismatch vs reference"

    # Also exercise scale=True path for coverage of the x_scale branch.
    out2 = jax.block_until_ready(
        sine_positional_embedding(x, alpha, embedding_dim=D, scale=True)
    )
    ref2 = _reference(x, alpha, embedding_dim=D, scale=True)
    assert jnp.allclose(out2, ref2, atol=1e-5, rtol=1e-5), "mismatch (scale=True)"

    print("KERNEL_OK")
</pallas_src>

<mosaic_0001>
module attributes {stable_mosaic.version = 11 : i64} {
  func.func @_sine_pe_kernel(%arg0: i32, %arg1: i32, %arg2: memref<1xf32, #tpu.memory_space<smem>>, %arg3: memref<1x8x32xf32, #tpu.memory_space<vmem>>, %arg4: memref<8x32xf32, #tpu.memory_space<vmem>>, %arg5: memref<1x8x32xf32, #tpu.memory_space<vmem>>) attributes {dimension_semantics = [#tpu.dimension_semantics<parallel>, #tpu.dimension_semantics<parallel>], iteration_bounds = array<i64: 1, 2>, scalar_prefetch = 0 : i64, scratch_operands = 0 : i64, tpu.core_type = #tpu.core_type<tc>, window_params = [{transform_indices = @transform_0, window_bounds = array<i64: 1>}, {transform_indices = @transform_1, window_bounds = array<i64: 1, 8, 32>}, {transform_indices = @transform_2, window_bounds = array<i64: 8, 32>}, {transform_indices = @transform_3, window_bounds = array<i64: 1, 8, 32>}]} {
    %c0 = arith.constant 0 : index
    %0 = memref.load %arg2[%c0] : memref<1xf32, #tpu.memory_space<smem>>
    %c0_0 = arith.constant 0 : index
    %c0_1 = arith.constant 0 : index
    %c0_2 = arith.constant 0 : index
    %1 = vector.load %arg3[%c0_0, %c0_1, %c0_2] : memref<1x8x32xf32, #tpu.memory_space<vmem>>, vector<1x8x32xf32>
    %2 = vector.shape_cast %1 : vector<1x8x32xf32> to vector<8x32xf32>
    %c0_3 = arith.constant 0 : index
    %c0_4 = arith.constant 0 : index
    %3 = vector.load %arg4[%c0_3, %c0_4] : memref<8x32xf32, #tpu.memory_space<vmem>>, vector<8x32xf32>
    %4 = vector.broadcast %0 : f32 to vector<8x32xf32>
    %5 = arith.mulf %4, %3 : vector<8x32xf32>
    %6 = arith.addf %2, %5 : vector<8x32xf32>
    %c0_5 = arith.constant 0 : index
    %c0_6 = arith.constant 0 : index
    %c0_7 = arith.constant 0 : index
    %7 = vector.load %arg5[%c0_5, %c0_6, %c0_7] : memref<1x8x32xf32, #tpu.memory_space<vmem>>, vector<1x8x32xf32>
    %8 = vector.shape_cast %7 : vector<1x8x32xf32> to vector<8x32xf32>
    %9 = vector.shape_cast %6 : vector<8x32xf32> to vector<1x8x32xf32>
    tpu.vector_store %arg5[%c0_5, %c0_6, %c0_7], %9 {strides = array<i32>} : memref<1x8x32xf32, #tpu.memory_space<vmem>>, vector<1x8x32xf32>,
    return
  }
  func.func @transform_0(%arg0: i32, %arg1: i32) -> i32 {
    %c0_i32 = arith.constant 0 : i32
    %c0_i32_0 = arith.constant 0 : i32
    return %c0_i32 : i32
  }
  func.func @transform_1(%arg0: i32, %arg1: i32) -> (i32, i32, i32) {
    %c0_i32 = arith.constant 0 : i32
    %c0_i32_0 = arith.constant 0 : i32
    return %arg1, %arg0, %c0_i32 : i32, i32, i32
  }
  func.func @transform_2(%arg0: i32, %arg1: i32) -> (i32, i32) {
    %c0_i32 = arith.constant 0 : i32
    %c0_i32_0 = arith.constant 0 : i32
    return %arg0, %c0_i32 : i32, i32
  }
  func.func @transform_3(%arg0: i32, %arg1: i32) -> (i32, i32, i32) {
    %c0_i32 = arith.constant 0 : i32
    %c0_i32_0 = arith.constant 0 : i32
    return %arg1, %arg0, %c0_i32 : i32, i32, i32
  }
}

</mosaic_0001>

<llo_original>
// kernel: tpu_custom_call.1
$region0: #{tpu_custom_call.1}
  #allocation0 [shape = 'u32[]', space=smem, size = 0x4, offset = 0x4, fixed_abs, tag = 'smem constant byte address 0x4 - core index']
  #allocation1 [shape = 'u32[144,128]{1,0:T(1,128)}', space=vmem, size = 0x12000, scoped, tag = 'internal scratch']
  #allocation2 [shape = 'f32[1]{0:T(128)S(6)}', space=smem, size = 0x200, scoped, tag = 'scoped memory for tpu_custom_call.1']
  %s0 = inlined_call_operand.<no memory space> [shape: f32[1], index: 0, kind: input, shape index: {}]
  %s1 = inlined_call_operand.hbm [shape: f32[2,8,32], index: 1, kind: input, shape index: {}]
  %s2 = inlined_call_operand.hbm [shape: f32[8,32], index: 2, kind: input, shape index: {}]
  %s3 = inlined_call_operand.hbm [shape: f32[2,8,32], index: 3, kind: output, shape index: {}]
  %s4 = sld [smem:[#allocation0]]
  $region53: #{tpu_custom_call.1} parent=0
    _
  %s6 = ssub.s32 1, %s4
  %s7 = scalar_select 0, %s6, %s4
  %8 = sst [smem:[#allocation2]] %s0
  $region1: #{tpu_custom_call.1} parent=0
    #allocation3 [shape = 'u8[8192]{0}', space=vmem, size = 0x2000, scoped, tag = 'input window, operand 1']
    #allocation4 [shape = 's32[2]{0}', space=sflag, size = 0x8, scoped, tag = 'scoped memory for tpu_custom_call.1']
    #allocation5 [shape = 's32[2]{0}', space=sflag, size = 0x8, scoped, tag = 'scoped memory for tpu_custom_call.1']
    #allocation6 [shape = 'u8[4096]{0}', space=vmem, size = 0x1000, scoped, tag = 'input window, operand 2, single buffered']
    #allocation7 [shape = 's32[1]{0}', space=sflag, size = 0x4, scoped, tag = 'scoped memory for tpu_custom_call.1']
    #allocation8 [shape = 'u8[8192]{0}', space=vmem, size = 0x2000, scoped, tag = 'output window, operand 0']
    %9 = vsyncpa [#allocation4], 0
    %s10 = scalar_lea.sflag [#allocation4], 1
    %11 = vsyncpa %s10, 0
    %12 = vsyncpa [#allocation7], 0
    %13 = vsyncpa [#allocation5], 0
    %s14 = scalar_lea.sflag [#allocation5], 1
    %15 = vsyncpa %s14, 0
    loop: start=0, step=1, limit=4
    $region2: #{tpu_custom_call.1} parent=1 // loop_pre_header
      _
    $region3: #{tpu_custom_call.1} parent=1 // loop_header
      %s17 = sphi 0, %s21
      %p18 = scmp.ge.s32.totalorder %s17, 4
      %s24 = sphi 0, %s36
      %s25 = sphi 0, %s32
      %s26 = sphi 0, %s24
      %s27 = sphi 0, %s25
      %s28 = sphi 0, %s26
      %s29 = sphi 0, %s27
      %s37 = sphi 0, %s37
      %s39 = sphi 0, %s37
      %s40 = sphi 0, %s39
      %s54 = sphi 0, %s40
      %s62 = sphi 0, %s64
      %s65 = sphi 0, %s62
      %s66 = sphi 0, %s65
      %s82 = sphi 0, %s66
      %s88 = sphi 0, %s90
      %s91 = sphi 0, %s88
      %s92 = sphi 0, %s91
      %s108 = sphi 0, %s92
      %s116 = sphi 0, %s118
      %s119 = sphi 0, %s116
      %s120 = sphi 0, %s119
      %s136 = sphi 0, %s120
    $region4: #{tpu_custom_call.1} parent=1 // loop_header_branch
      %20 = sbr.rel (%p18) target = $region8
    $region5: #{tpu_custom_call.1} parent=1 // loop_body
      %s22 = ssub.s32 %s17, 1
      %s23 = ssub.s32 %s17, 2
      %s30 = sadd.s32 1, %s25
      %p31 = scmp.ge.s32.totalorder %s30, 2
      %s32 = scalar_select %p31, 0, %s30
      %s33 = sadd.s32 1, %s24
      %s34 = scalar_select %p31, %s33, %s24
      %p35 = scmp.ge.s32.totalorder %s34, 1
      %s36 = scalar_select %p35, 0, %s34
      %s38 = sadd.s32 %s37, 1
      %p41 = scmp.eq.s32.totalorder %s17, 1
      %p42 = scmp.ne.s32.totalorder %s37, %s39
      %p43 = scmp.eq.s32.totalorder %s17, 0
      %p44 = por %p42, %p43
      %p45 = scmp.ne.s32.totalorder %s37, %s39
      %p46 = scmp.eq.s32.totalorder %s22, 1
      %p47 = por %p45, %p46
      %p48 = scmp.ne.s32.totalorder %s39, %s40
      %p49 = scmp.eq.s32.totalorder %s22, 0
      %p50 = por %p48, %p49
      %p51 = scmp.ne.s32.totalorder %s39, %s40
      %p52 = scmp.eq.s32.totalorder %s23, 1
      %p53 = por %p51, %p52
      %p55 = scmp.ne.s32.totalorder %s40, %s54
      %p56 = scmp.eq.s32.totalorder %s23, 0
      %p57 = por %p55, %p56
      %s58 = ssub.s32 %s25, %s32
      %s59 = ssub.s32 %s24, %s36
      %s60 = sor.u32 %s58, %s59
      %p61 = scmp.eq.s32.totalorder %s60, 0
      %s63 = sadd.s32 %s62, 1
      %s64 = scalar_select %p61, %s62, %s63
      %p67 = pneg %p61
      %p68 = scmp.eq.s32.totalorder %s17, 1
      %p69 = por %p67, %p68
      %p70 = scmp.ne.s32.totalorder %s62, %s65
      %p71 = scmp.eq.s32.totalorder %s17, 0
      %p72 = por %p70, %p71
      %p73 = scmp.ne.s32.totalorder %s62, %s65
      %p74 = scmp.eq.s32.totalorder %s22, 1
      %p75 = por %p73, %p74
      %p76 = scmp.ne.s32.totalorder %s65, %s66
      %p77 = scmp.eq.s32.totalorder %s22, 0
      %p78 = por %p76, %p77
      %p79 = scmp.ne.s32.totalorder %s65, %s66
      %p80 = scmp.eq.s32.totalorder %s23, 1
      %p81 = por %p79, %p80
      %p83 = scmp.ne.s32.totalorder %s66, %s82
      %p84 = scmp.eq.s32.totalorder %s23, 0
      %p85 = por %p83, %p84
      %s86 = ssub.s32 %s24, %s36
      %p87 = scmp.eq.s32.totalorder %s86, 0
      %s89 = sadd.s32 %s88, 1
      %s90 = scalar_select %p87, %s88, %s89
      %p93 = pneg %p87
      %p94 = scmp.eq.s32.totalorder %s17, 1
      %p95 = por %p93, %p94
      %p96 = scmp.ne.s32.totalorder %s88, %s91
      %p97 = scmp.eq.s32.totalorder %s17, 0
      %p98 = por %p96, %p97
      %p99 = scmp.ne.s32.totalorder %s88, %s91
      %p100 = scmp.eq.s32.totalorder %s22, 1
      %p101 = por %p99, %p100
      %p102 = scmp.ne.s32.totalorder %s91, %s92
      %p103 = scmp.eq.s32.totalorder %s22, 0
      %p104 = por %p102, %p103
      %p105 = scmp.ne.s32.totalorder %s91, %s92
      %p106 = scmp.eq.s32.totalorder %s23, 1
      %p107 = por %p105, %p106
      %p109 = scmp.ne.s32.totalorder %s92, %s108
      %p110 = scmp.eq.s32.totalorder %s23, 0
      %p111 = por %p109, %p110
      %s112 = ssub.s32 %s25, %s32
      %s113 = ssub.s32 %s24, %s36
      %s114 = sor.u32 %s112, %s113
      %p115 = scmp.eq.s32.totalorder %s114, 0
      %s117 = sadd.s32 %s116, 1
      %s118 = scalar_select %p115, %s116, %s117
      %p121 = pneg %p115
      %p122 = scmp.eq.s32.totalorder %s17, 1
      %p123 = por %p121, %p122
      %p124 = scmp.ne.s32.totalorder %s116, %s119
      %p125 = scmp.eq.s32.totalorder %s17, 0
      %p126 = por %p124, %p125
      %p127 = scmp.ne.s32.totalorder %s116, %s119
      %p128 = scmp.eq.s32.totalorder %s22, 1
      %p129 = por %p127, %p128
      %p130 = scmp.ne.s32.totalorder %s119, %s120
      %p131 = scmp.eq.s32.totalorder %s22, 0
      %p132 = por %p130, %p131
      %p133 = scmp.ne.s32.totalorder %s119, %s120
      %p134 = scmp.eq.s32.totalorder %s23, 1
      %p135 = por %p133, %p134
      %p137 = scmp.ne.s32.totalorder %s120, %s136
      %p138 = scmp.eq.s32.totalorder %s23, 0
      %p139 = por %p137, %p138
      %p140 = scmp.le.s32.totalorder 1, %s17
      %p141 = scmp.lt.s32.totalorder %s17, 3
      %p142 = pnand %p140, %p141
      %p143 = pneg %p142
      // Predicated region
      $region9: #{tpu_custom_call.1} parent=5 // pred_check
        _
      $region10: #{tpu_custom_call.1} parent=5 // pred_check_branch
        %145 = sbr.rel (%p142) target = $region12
      $region11: #{tpu_custom_call.1} parent=5 // pred_region
        %s146 = ssub.s32 %s17, 1
        // Predicated region
        $region13: #{tpu_custom_call.1} parent=11 // pred_check
          %p147 = pneg %p50
        $region14: #{tpu_custom_call.1} parent=11 // pred_check_branch
          %149 = sbr.rel (%p147) target = $region16
        $region15: #{tpu_custom_call.1} parent=11 // pred_region
          _
        $region16: #{tpu_custom_call.1} parent=11 // pred_fallthru
          _
        // Predicated region
        $region17: #{tpu_custom_call.1} parent=11 // pred_check
          %p150 = pneg %p104
        $region18: #{tpu_custom_call.1} parent=11 // pred_check_branch
          %152 = sbr.rel (%p150) target = $region20
        $region19: #{tpu_custom_call.1} parent=11 // pred_region
          %s154 = ssub.s32 128, 128
          %155 = vsyncadd [#allocation7], %s154
          %s156 = smul.addr %s26, 128
          %s157 = scalar_lea.hbm %s2, %s156
          %s159 = sshll.u32 [#allocation6], 4
          %s160 = int_to_ptr.vmem [resolvable:$true] %s159
          %162 = dma.hbm_to_vmem [thread:$0]  %s157, 128, %s160, [#allocation7]
        $region20: #{tpu_custom_call.1} parent=11 // pred_fallthru
          _
      $region12: #{tpu_custom_call.1} parent=5 // pred_fallthru
        _
      %p163 = scmp.lt.s32.totalorder %s17, 2
      // Predicated region
      $region21: #{tpu_custom_call.1} parent=5 // pred_check
        %p164 = pneg %p163
      $region22: #{tpu_custom_call.1} parent=5 // pred_check_branch
        %166 = sbr.rel (%p164) target = $region24
      $region23: #{tpu_custom_call.1} parent=5 // pred_region
        // Predicated region
        $region25: #{tpu_custom_call.1} parent=23 // pred_check
          %p167 = pneg %p72
        $region26: #{tpu_custom_call.1} parent=23 // pred_check_branch
          %169 = sbr.rel (%p167) target = $region28
        $region27: #{tpu_custom_call.1} parent=23 // pred_region
          %s170 = sand.u32 %s62, 1
          %s171 = scalar_lea.sflag [#allocation4], %s170
          %s172 = sand.u32 %s62, 1
          %s173 = smul.addr %s172, 8
          %s174 = scalar_lea.vmem [#allocation3], %s173
          %s176 = ssub.s32 128, 128
          %177 = vsyncadd %s171, %s176
          %s178 = sadd.s32 %s24, %s25
          %s179 = smul.addr %s178, 128
          %s180 = scalar_lea.hbm %s1, %s179
          %s182 = sshll.u32 %s174, 4
          %s183 = int_to_ptr.vmem [resolvable:$true] %s182
          %185 = dma.hbm_to_vmem [thread:$0]  %s180, 128, %s183, %s171
        $region28: #{tpu_custom_call.1} parent=23 // pred_fallthru
          _
      $region24: #{tpu_custom_call.1} parent=5 // pred_fallthru
        _
      %p186 = scmp.le.s32.totalorder 1, %s17
      %p187 = scmp.lt.s32.totalorder %s17, 3
      %p188 = pnand %p186, %p187
      %p189 = pneg %p188
      // Predicated region
      $region29: #{tpu_custom_call.1} parent=5 // pred_check
        _
      $region30: #{tpu_custom_call.1} parent=5 // pred_check_branch
        %191 = sbr.rel (%p188) target = $region32
      $region31: #{tpu_custom_call.1} parent=5 // pred_region
        %s192 = ssub.s32 %s17, 1
        %s193 = sand.u32 %s65, 1
        %s194 = scalar_lea.sflag [#allocation4], %s193
        %s195 = sand.u32 %s65, 1
        %s196 = smul.addr %s195, 8
        %s197 = scalar_lea.vmem [#allocation3], %s196
        // Predicated region
        $region33: #{tpu_custom_call.1} parent=31 // pred_check
          %p198 = pneg %p78
        $region34: #{tpu_custom_call.1} parent=31 // pred_check_branch
          %200 = sbr.rel (%p198) target = $region36
        $region35: #{tpu_custom_call.1} parent=31 // pred_region
          %201 = dma.done %s194, 128
        $region36: #{tpu_custom_call.1} parent=31 // pred_fallthru
          _
        // Predicated region
        $region37: #{tpu_custom_call.1} parent=31 // pred_check
          %p202 = pneg %p104
        $region38: #{tpu_custom_call.1} parent=31 // pred_check_branch
          %204 = sbr.rel (%p202) target = $region40
        $region39: #{tpu_custom_call.1} parent=31 // pred_region
          %205 = dma.done [#allocation7], 128
        $region40: #{tpu_custom_call.1} parent=31 // pred_fallthru
          _
        %p206 = pneg %p50
        %p207 = pneg %p47
        %s208 = sand.u32 %s65, 1
        %s209 = scalar_lea.sflag [#allocation4], %s208
        %s210 = sand.u32 %s65, 1
        %s211 = smul.addr %s210, 8
        %s212 = scalar_lea.vmem [#allocation3], %s211
        %p213 = pneg %p78
        %p214 = pneg %p75
        %p215 = pneg %p104
        %p216 = pneg %p101
        %p217 = pneg %p132
        %p218 = pneg %p129
        %s219 = sand.u32 %s119, 1
        %s220 = scalar_lea.sflag [#allocation5], %s219
        %s221 = sand.u32 %s119, 1
        %s222 = smul.addr %s221, 8
        %s223 = scalar_lea.vmem [#allocation8], %s222
        %s224 = sld [smem:[#allocation2]]
        %v225 = vld [vmem:[%s197] sm:$0xff]
        %v226 = vld [vmem:[#allocation6] sm:$0xff]
        %v227 = vstv %s224
        %v228 = vmul.f32 %v227, %v226
        %v229 = vadd.f32 %v225, %v228
        %vm230 = vcmask 261120
        %231 = vst.msk [vmem:[%s223] sm:$0xff] %vm230, %v229
        %s232 = sand.u32 %s119, 1
        %s233 = scalar_lea.sflag [#allocation5], %s232
        %s234 = sand.u32 %s119, 1
        %s235 = smul.addr %s234, 8
        %s236 = scalar_lea.vmem [#allocation8], %s235
        // Predicated region
        $region41: #{tpu_custom_call.1} parent=31 // pred_check
          %p237 = pneg %p129
        $region42: #{tpu_custom_call.1} parent=31 // pred_check_branch
          %239 = sbr.rel (%p237) target = $region44
        $region43: #{tpu_custom_call.1} parent=31 // pred_region
          %s241 = ssub.s32 128, 128
          %242 = vsyncadd %s233, %s241
          %s243 = sadd.s32 %s26, %s27
          %s244 = smul.addr %s243, 128
          %s245 = scalar_lea.hbm %s3, %s244
          %s247 = sshll.u32 %s236, 4
          %s248 = int_to_ptr.vmem [resolvable:$true] %s247
          %250 = dma.vmem_to_hbm [thread:$0]  %s248, 128, %s245, %s233
        $region44: #{tpu_custom_call.1} parent=31 // pred_fallthru
          _
      $region32: #{tpu_custom_call.1} parent=5 // pred_fallthru
        _
      %p251 = scmp.le.s32.totalorder 2, %s17
      // Predicated region
      $region45: #{tpu_custom_call.1} parent=5 // pred_check
        %p252 = pneg %p251
      $region46: #{tpu_custom_call.1} parent=5 // pred_check_branch
        %254 = sbr.rel (%p252) target = $region48
      $region47: #{tpu_custom_call.1} parent=5 // pred_region
        %s255 = ssub.s32 %s17, 2
        // Predicated region
        $region49: #{tpu_custom_call.1} parent=47 // pred_check
          %p256 = pneg %p135
        $region50: #{tpu_custom_call.1} parent=47 // pred_check_branch
          %258 = sbr.rel (%p256) target = $region52
        $region51: #{tpu_custom_call.1} parent=47 // pred_region
          %s259 = sand.u32 %s120, 1
          %s260 = scalar_lea.sflag [#allocation5], %s259
          %s261 = sand.u32 %s120, 1
          %s262 = smul.addr %s261, 8
          %s263 = scalar_lea.vmem [#allocation8], %s262
          %264 = dma.done %s260, 128
        $region52: #{tpu_custom_call.1} parent=47 // pred_fallthru
          _
      $region48: #{tpu_custom_call.1} parent=5 // pred_fallthru
        _
    $region6: #{tpu_custom_call.1} parent=1 // loop_footer
      %s21 = sadd.s32 1, %s17
    $region7: #{tpu_custom_call.1} parent=1 // loop_footer_branch
      %16 = sbr.rel target = $region3
    $region8: #{tpu_custom_call.1} parent=1 // loop_exit
      _
    %265 = vsyncpa [#allocation4], 1
    %s266 = scalar_lea.sflag [#allocation4], 1
    %267 = vsyncpa %s266, 1
    %268 = vsyncpa [#allocation7], 1
    %269 = vsyncpa [#allocation5], 1
    %s270 = scalar_lea.sflag [#allocation5], 1
    %271 = vsyncpa %s270, 1

</llo_original>
